<compile_context>
chip_gen: v7x
topology: tpu7x:2x2x1
jax: 0.10.0
libtpu: 0.0.40
codegen_flags: <defaults>
</compile_context>

<pallas_src>
import functools

import jax
import jax.numpy as jnp
from jax.experimental import pallas as pl
from jax.experimental.pallas import tpu as pltpu


# ---------------------------------------------------------------------------
# Generation-aware VMEM budgeting.
# ---------------------------------------------------------------------------
def _vmem_budgets():
    try:
        cap = pltpu.get_tpu_info().vmem_capacity_bytes
    except Exception:                      # conservative fallback
        cap = 64 * 1024 * 1024
    if cap >= 100 * 1024 * 1024:           # v5e / v6e class (128 MiB VMEM, 1 TC/chip)
        vmem_limit = 96 * 1024 * 1024
        block_budget = 64 * 1024 * 1024    # big tiles -> few grid steps, deep pipeline
        prefer_batch_split = False
    else:                                  # v7x class (64 MiB VMEM per TC, 2 TC/chip)
        vmem_limit = 44 * 1024 * 1024
        block_budget = 24 * 1024 * 1024
        prefer_batch_split = True          # keep >= 2 blocks on the parallel batch axis
    return vmem_limit, block_budget, prefer_batch_split


def _choose_blocks(B, S, H, itemsize, block_budget, prefer_batch_split):
    """Pick (TB, TS) batch / sequence block sizes.

    Legality (Mosaic (8,128) rule):
      * TB is the sublane dim of the (B, S) mask block and the (B, H) output
        block -> TB == B or TB a multiple of 8.
      * TS is the lane dim of the mask block and the sublane dim of the embedding
        block -> TS == S or TS a multiple of 128.
    The budget covers: double-buffered embedding block + double-buffered f32 mask
    block (lane dim padded to >= 128) + f32 accumulator scratch + output block.
    """
    def per_row(ts):
        return (2 * ts * H * itemsize          # emb block rows, double buffered
                + 2 * max(ts, 128) * 4         # f32 mask rows, double buffered
                + 3 * H * 4)                   # f32 acc scratch + out block rows

    tb_cap = B
    if prefer_batch_split and B >= 16:
        # >= 2 batch blocks so both TensorCores get work (TB must stay a mult of 8).
        tb_cap = max(8, (pl.cdiv(B, 2) // 8) * 8)

    tb_fit = block_budget // max(per_row(S), 1)
    tb = min(tb_fit, tb_cap)
    if tb >= B:
        return int(B), int(S)
    if tb >= 8:
        return int((tb // 8) * 8), int(S)

    # Even 8 rows at full sequence length do not fit: tile the sequence too.
    tb = B if B < 8 else 8
    ts = (block_budget - 3 * tb * H * 4) // max(2 * tb * (H * itemsize + 4), 1)
    ts = max(128, (ts // 128) * 128)
    if ts >= S:
        return int(tb), int(S)
    for cand in range(ts, 127, -128):          # prefer a TS that divides S (no tail block)
        if S % cand == 0:
            return int(tb), int(cand)
    return int(tb), int(ts)


# ---------------------------------------------------------------------------
# Kernels.
# ---------------------------------------------------------------------------
def _cls_kernel(emb_ref, out_ref):
    # emb_ref is (TB, H): sequence dim squeezed to token 0 by the BlockSpec.
    out_ref[...] = emb_ref[...].astype(out_ref.dtype)


def _mean_single_kernel(emb_ref, mask_ref, out_ref):
    emb = emb_ref[...].astype(jnp.float32)                 # (TB, S, H)
    m = mask_ref[...]                                      # (TB, S) f32 {0., 1.}
    s = jnp.sum(emb * m[:, :, None], axis=1)               # (TB, H)
    n = jnp.maximum(jnp.sum(m, axis=1, keepdims=True), 1e-8)
    out_ref[...] = (s * pl.reciprocal(n)).astype(out_ref.dtype)


def _max_single_kernel(emb_ref, mask_ref, out_ref):
    emb = emb_ref[...].astype(jnp.float32)                 # (TB, S, H)
    keep = mask_ref[...] > 0.0                             # (TB, S)
    masked = jnp.where(keep[:, :, None], emb, -jnp.inf)
    out_ref[...] = jnp.max(masked, axis=1).astype(out_ref.dtype)


def _mean_kernel(emb_ref, mask_ref, out_ref, acc_ref, len_ref, *, ts, s_total):
    s_step = pl.program_id(1)

    @pl.when(s_step == 0)
    def _():
        acc_ref[...] = jnp.zeros_like(acc_ref)
        len_ref[...] = jnp.zeros_like(len_ref)

    emb = emb_ref[...].astype(jnp.float32)                 # (TB, TS, H)
    m = mask_ref[...]                                      # (TB, TS) f32
    if s_total % ts != 0:
        # Padded sequence tail: zero BOTH mask and embeddings (stale tail data
        # could be NaN; NaN * 0 would otherwise poison the accumulator).
        pos = jax.lax.broadcasted_iota(jnp.int32, m.shape, 1) + s_step * ts
        valid = pos < s_total
        m = jnp.where(valid, m, 0.0)
        emb = jnp.where(valid[:, :, None], emb, 0.0)
    acc_ref[...] += jnp.sum(emb * m[:, :, None], axis=1)
    len_ref[...] += jnp.sum(m, axis=1, keepdims=True)

    @pl.when(s_step == pl.num_programs(1) - 1)
    def _():
        inv = pl.reciprocal(jnp.maximum(len_ref[...], 1e-8))   # clamp_min(n, 1e-8)
        out_ref[...] = (acc_ref[...] * inv).astype(out_ref.dtype)


def _max_kernel(emb_ref, mask_ref, out_ref, acc_ref, *, ts, s_total):
    s_step = pl.program_id(1)

    @pl.when(s_step == 0)
    def _():
        acc_ref[...] = jnp.full_like(acc_ref, -jnp.inf)

    emb = emb_ref[...].astype(jnp.float32)                 # (TB, TS, H)
    keep = mask_ref[...] > 0.0                             # (TB, TS)
    if s_total % ts != 0:
        pos = jax.lax.broadcasted_iota(jnp.int32, keep.shape, 1) + s_step * ts
        keep = jnp.logical_and(keep, pos < s_total)
    masked = jnp.where(keep[:, :, None], emb, -jnp.inf)
    acc_ref[...] = jnp.maximum(acc_ref[...], jnp.max(masked, axis=1))

    @pl.when(s_step == pl.num_programs(1) - 1)
    def _():
        out_ref[...] = acc_ref[...].astype(out_ref.dtype)


# ---------------------------------------------------------------------------
# Wrapper.
# ---------------------------------------------------------------------------
def pooling(mode, token_embeddings, attention_mask, *, block_sizes=None):
    """JAX/Pallas equivalent of Pooling(mode).forward(token_embeddings, attention_mask)."""
    assert mode in ("mean", "max", "cls"), f"Unknown pooling mode: {mode}"
    B, S, H = token_embeddings.shape
    out_dtype = token_embeddings.dtype
    itemsize = token_embeddings.dtype.itemsize
    vmem_limit, block_budget, prefer_split = _vmem_budgets()

    if mode == "cls":
        # Squeezed sequence dim: only the first-token row of each example is DMA'd.
        per_row = 4 * H * itemsize                     # in + out, double buffered
        tb_cap = B
        if prefer_split and B >= 16:
            tb_cap = max(8, (pl.cdiv(B, 2) // 8) * 8)
        tb = min(block_budget // max(per_row, 1), tb_cap)
        if tb >= B:
            tb = B
        elif tb >= 8:
            tb = (tb // 8) * 8
        else:
            tb = B if B < 8 else 8
        grid_spec = pltpu.PrefetchScalarGridSpec(
            num_scalar_prefetch=0,
            grid=(pl.cdiv(B, tb),),
            in_specs=[pl.BlockSpec((tb, None, H), lambda b: (b, 0, 0))],
            out_specs=pl.BlockSpec((tb, H), lambda b: (b, 0)),
        )
        return pl.pallas_call(
            _cls_kernel,
            out_shape=jax.ShapeDtypeStruct((B, H), out_dtype),
            grid_spec=grid_spec,
            compiler_params=pltpu.CompilerParams(
                dimension_semantics=("parallel",),
                vmem_limit_bytes=vmem_limit),
        )(token_embeddings)

    # Mask stays 2-D (B, S) f32 -- ~(H*itemsize/4)x fewer bytes than a (B, S, 1)
    # lane-padded layout; the broadcast over H happens in-kernel under the DMA.
    mask2 = attention_mask.astype(jnp.float32)

    if block_sizes is None:
        tb, ts = _choose_blocks(B, S, H, itemsize, block_budget, prefer_split)
    else:
        tb, ts = block_sizes
    n_b, n_s = pl.cdiv(B, tb), pl.cdiv(S, ts)

    if n_s == 1:
        # Whole sequence in one block: no accumulator scratch, no predication.
        grid_spec = pltpu.PrefetchScalarGridSpec(
            num_scalar_prefetch=0,
            grid=(n_b,),
            in_specs=[pl.BlockSpec((tb, S, H), lambda b: (b, 0, 0)),
                      pl.BlockSpec((tb, S), lambda b: (b, 0))],
            out_specs=pl.BlockSpec((tb, H), lambda b: (b, 0)),
        )
        kernel = _mean_single_kernel if mode == "mean" else _max_single_kernel
        return pl.pallas_call(
            kernel,
            out_shape=jax.ShapeDtypeStruct((B, H), out_dtype),
            grid_spec=grid_spec,
            compiler_params=pltpu.CompilerParams(
                dimension_semantics=("parallel",),
                vmem_limit_bytes=vmem_limit),
        )(token_embeddings, mask2)

    # Sequence-tiled reduction: batch axis "parallel", sequence axis "arbitrary".
    emb_spec = pl.BlockSpec((tb, ts, H), lambda b, s: (b, s, 0))
    mask_spec = pl.BlockSpec((tb, ts), lambda b, s: (b, s))
    out_spec = pl.BlockSpec((tb, H), lambda b, s: (b, 0))
    cparams = pltpu.CompilerParams(
        dimension_semantics=("parallel", "arbitrary"),
        vmem_limit_bytes=vmem_limit)

    if mode == "mean":
        kernel = functools.partial(_mean_kernel, ts=ts, s_total=S)
        scratch = [pltpu.VMEM((tb, H), jnp.float32),     # weighted-sum accumulator
                   pltpu.VMEM((tb, 1), jnp.float32)]     # in-kernel token count
    else:
        kernel = functools.partial(_max_kernel, ts=ts, s_total=S)
        scratch = [pltpu.VMEM((tb, H), jnp.float32)]

    grid_spec = pltpu.PrefetchScalarGridSpec(
        num_scalar_prefetch=0,
        grid=(n_b, n_s),
        in_specs=[emb_spec, mask_spec],
        out_specs=out_spec,
        scratch_shapes=scratch,
    )
    return pl.pallas_call(
        kernel,
        out_shape=jax.ShapeDtypeStruct((B, H), out_dtype),
        grid_spec=grid_spec,
        compiler_params=cparams,
    )(token_embeddings, mask2)


if __name__ == "__main__":
    # TODO(synk): SentenceEmbedder's transformer backbone (AutoModel) + tokenizer are
    # not kernel-translation targets; only the Pooling head is implemented here.
    key = jax.random.PRNGKey(0)

    def reference(mode, emb, mask):
        maskf = mask.astype(jnp.float32)[:, :, None]
        if mode == "cls":
            return emb[:, 0]
        if mode == "mean":
            return jnp.sum(emb * maskf, axis=1) / jnp.maximum(jnp.sum(maskf, axis=1), 1e-8)
        return jnp.max(jnp.where(mask[:, :, None], emb,
                                 jnp.full_like(emb, -jnp.inf)), axis=1)

    # 1) Small shapes (single sequence-block path + cls).
    B, S, H = 2, 8, 32
    token_embeddings = jax.random.normal(key, (B, S, H), dtype=jnp.float32)
    lengths = jnp.array([5, 8], dtype=jnp.int32)
    attention_mask = jnp.arange(S, dtype=jnp.int32)[None, :] < lengths[:, None]   # (B, S) bool

    for mode in ("mean", "max", "cls"):
        out = jax.block_until_ready(pooling(mode, token_embeddings, attention_mask))
        assert out.shape == (B, H), (mode, out.shape)
        assert jnp.allclose(out, reference(mode, token_embeddings, attention_mask),
                            atol=1e-5, rtol=1e-5), f"mismatch in mode {mode}"

    # 2) Forced sequence tiling (multi-step reduction path, incl. padded tail masking).
    B2, S2, H2 = 8, 320, 128
    k1, k2 = jax.random.split(key)
    emb2 = jax.random.normal(k1, (B2, S2, H2), dtype=jnp.float32)
    lens2 = jax.random.randint(k2, (B2,), 1, S2 + 1)
    mask2 = jnp.arange(S2, dtype=jnp.int32)[None, :] < lens2[:, None]
    for mode in ("mean", "max"):
        out = jax.block_until_ready(pooling(mode, emb2, mask2, block_sizes=(8, 128)))
        assert out.shape == (B2, H2), (mode, out.shape)
        assert jnp.allclose(out, reference(mode, emb2, mask2),
                            atol=1e-4, rtol=1e-4), f"mismatch in tiled mode {mode}"

    print("KERNEL_OK")
</pallas_src>

<mosaic_0001>
module attributes {stable_mosaic.version = 11 : i64} {
  func.func @_mean_single_kernel(%arg0: i32, %arg1: memref<2x8x32xf32, #tpu.memory_space<vmem>>, %arg2: memref<2x8xf32, #tpu.memory_space<vmem>>, %arg3: memref<2x32xf32, #tpu.memory_space<vmem>>) attributes {dimension_semantics = [#tpu.dimension_semantics<parallel>], iteration_bounds = array<i64: 1>, scalar_prefetch = 0 : i64, scratch_operands = 0 : i64, tpu.core_type = #tpu.core_type<tc>, window_params = [{transform_indices = @transform_0, window_bounds = array<i64: 2, 8, 32>}, {transform_indices = @transform_1, window_bounds = array<i64: 2, 8>}, {transform_indices = @transform_2, window_bounds = array<i64: 2, 32>}]} {
    %c0 = arith.constant 0 : index
    %c0_0 = arith.constant 0 : index
    %c0_1 = arith.constant 0 : index
    %0 = vector.load %arg1[%c0, %c0_0, %c0_1] : memref<2x8x32xf32, #tpu.memory_space<vmem>>, vector<2x8x32xf32>
    %c0_2 = arith.constant 0 : index
    %c0_3 = arith.constant 0 : index
    %1 = vector.load %arg2[%c0_2, %c0_3] : memref<2x8xf32, #tpu.memory_space<vmem>>, vector<2x8xf32>
    %2 = vector.shape_cast %1 : vector<2x8xf32> to vector<2x8x1xf32>
    %3 = vector.broadcast %2 : vector<2x8x1xf32> to vector<2x8x32xf32>
    %4 = arith.mulf %0, %3 : vector<2x8x32xf32>
    %cst = arith.constant dense<0.000000e+00> : vector<2x32xf32>
    %5 = vector.multi_reduction <add>, %4, %cst [1] : vector<2x8x32xf32> to vector<2x32xf32>
    %cst_4 = arith.constant dense<0.000000e+00> : vector<2xf32>
    %6 = vector.multi_reduction <add>, %1, %cst_4 [1] : vector<2x8xf32> to vector<2xf32>
    %7 = vector.shape_cast %6 : vector<2xf32> to vector<2x1xf32>
    %cst_5 = arith.constant 9.99999993E-9 : f32
    %8 = vector.broadcast %cst_5 : f32 to vector<2x1xf32>
    %9 = arith.maximumf %7, %8 : vector<2x1xf32>
    %10 = tpu.reciprocal %9 : vector<2x1xf32> -> vector<2x1xf32>
    %11 = vector.broadcast %10 : vector<2x1xf32> to vector<2x32xf32>
    %12 = arith.mulf %5, %11 : vector<2x32xf32>
    %c0_6 = arith.constant 0 : index
    %c0_7 = arith.constant 0 : index
    %13 = vector.load %arg3[%c0_6, %c0_7] : memref<2x32xf32, #tpu.memory_space<vmem>>, vector<2x32xf32>
    tpu.vector_store %arg3[%c0_6, %c0_7], %12 {strides = array<i32>} : memref<2x32xf32, #tpu.memory_space<vmem>>, vector<2x32xf32>,
    return
  }
  func.func @transform_0(%arg0: i32) -> (i32, i32, i32) {
    %c0_i32 = arith.constant 0 : i32
    %c0_i32_0 = arith.constant 0 : i32
    %c0_i32_1 = arith.constant 0 : i32
    return %arg0, %c0_i32, %c0_i32_0 : i32, i32, i32
  }
  func.func @transform_1(%arg0: i32) -> (i32, i32) {
    %c0_i32 = arith.constant 0 : i32
    %c0_i32_0 = arith.constant 0 : i32
    return %arg0, %c0_i32 : i32, i32
  }
  func.func @transform_2(%arg0: i32) -> (i32, i32) {
    %c0_i32 = arith.constant 0 : i32
    %c0_i32_0 = arith.constant 0 : i32
    return %arg0, %c0_i32 : i32, i32
  }
}

</mosaic_0001>

<llo_original>
// kernel: tpu_custom_call.1
$region0: #{tpu_custom_call.1}
  #allocation0 [shape = 'u32[]', space=smem, size = 0x4, offset = 0x4, fixed_abs, tag = 'smem constant byte address 0x4 - core index']
  #allocation1 [shape = 'u32[144,128]{1,0:T(1,128)}', space=vmem, size = 0x12000, scoped, tag = 'internal scratch']
  %s0 = inlined_call_operand.hbm [shape: f32[2,8,32], index: 0, kind: input, shape index: {}]
  %s1 = inlined_call_operand.vmem [shape: f32[2,8], index: 1, kind: input, shape index: {}]
  %s2 = inlined_call_operand.hbm [shape: f32[2,32], index: 2, kind: output, shape index: {}]
  %s3 = sld [smem:[#allocation0]]
  $region22: #{tpu_custom_call.1} parent=0
    _
  %s5 = ssub.s32 1, %s3
  %s6 = scalar_select 0, %s5, %s3
  $region1: #{tpu_custom_call.1} parent=0
    #allocation2 [shape = 'u8[8192]{0}', space=vmem, size = 0x2000, scoped, tag = 'input window, operand 0, single buffered']
    #allocation3 [shape = 's32[1]{0}', space=sflag, size = 0x4, scoped, tag = 'scoped memory for tpu_custom_call.1']
    #allocation4 [shape = 's32[1]{0}', space=sflag, size = 0x4, scoped, tag = 'scoped memory for tpu_custom_call.1']
    #allocation5 [shape = 'u8[1024]{0}', space=vmem, size = 0x400, scoped, tag = 'output window, operand 0, single buffered']
    %7 = vsyncpa [#allocation3], 0
    %8 = vsyncpa [#allocation4], 0
    // Predicated region
    $region2: #{tpu_custom_call.1} parent=1 // pred_check
      _
    $region3: #{tpu_custom_call.1} parent=1 // pred_check_branch
      %10 = sbr.rel (0) target = $region5
    $region4: #{tpu_custom_call.1} parent=1 // pred_region
      %s12 = ssub.s32 256, 256
      %13 = vsyncadd [#allocation3], %s12
      %s14 = sshll.u32 [#allocation2], 4
      %s15 = int_to_ptr.vmem [resolvable:$true] %s14
      %20 = dma.hbm_to_vmem [thread:$0]  %s0, 256, %s15, [#allocation3], 128, 128, 8
    $region5: #{tpu_custom_call.1} parent=1 // pred_fallthru
      _
    // Predicated region
    $region6: #{tpu_custom_call.1} parent=1 // pred_check
      _
    $region7: #{tpu_custom_call.1} parent=1 // pred_check_branch
      %22 = sbr.rel (0) target = $region9
    $region8: #{tpu_custom_call.1} parent=1 // pred_region
      _
    $region9: #{tpu_custom_call.1} parent=1 // pred_fallthru
      _
    // Predicated region
    $region10: #{tpu_custom_call.1} parent=1 // pred_check
      _
    $region11: #{tpu_custom_call.1} parent=1 // pred_check_branch
      %24 = sbr.rel (0) target = $region13
    $region12: #{tpu_custom_call.1} parent=1 // pred_region
      %25 = dma.done [#allocation3], 256
    $region13: #{tpu_custom_call.1} parent=1 // pred_fallthru
      _
    %v26 = vld [vmem:[#allocation2] sm:$0xff]
    %v27 = vld [vmem:[#allocation2 + $0x8] sm:$0xff]
    %v28 = vld [vmem:[%s1] sm:$0x3]
    %v29 = vlaneseq
    %v30 = vshrl.u32 %v29, 7
    %v31 = vsub.s32 0, %v30
    %v32 = vrot.slane %v28, %v31
    %34 = vbcast.lane.b32.xlu0 %v32, 256
    %v35 = vpop.permute.xlu0 %34
    %v36 = vlaneseq
    %v37 = vshrl.u32 %v36, 7
    %v38 = vsub.s32 1, %v37
    %v39 = vrot.slane %v28, %v38
    %41 = vbcast.lane.b32.xlu0 %v39, 256
    %v42 = vpop.permute.xlu0 %41
    %v43 = vmul.f32 %v26, %v35
    %v44 = vmul.f32 %v27, %v42
    %vm45 = vcmask 261120
    %v46 = vsel %vm45, %v43, 0.0
    %v47 = vrot.slane %v46, 4
    %v48 = vadd.f32 %v46, %v47
    %v49 = vrot.slane %v48, 2
    %v50 = vadd.f32 %v48, %v49
    %v51 = vrot.slane %v50, 1
    %v52 = vadd.f32 %v50, %v51
    %v53 = vsel %vm45, %v44, 0.0
    %v54 = vrot.slane %v53, 4
    %v55 = vadd.f32 %v53, %v54
    %v56 = vrot.slane %v55, 2
    %v57 = vadd.f32 %v55, %v56
    %v58 = vrot.slane %v57, 1
    %v59 = vadd.f32 %v57, %v58
    %vm60 = vcmask 58368
    %v61 = vsel %vm60, %v28, 0.0
    %62 = vadd.xlane.f32.xlu0 %v61
    %v63 = vpop.xlane.xlu0 %62
    %v64 = vmax.f32 %v63, 1e-08
    %v65 = vrcp.pop %v64
    %v67 = vrot.slane %v65, 1
    %v70 = vmul.f32 %v52, %v65
    %v71 = vmul.f32 %v59, %v67
    %v74 = vrot.slane %v71, 7
    %vm75 = vcmask 1041409
    %v76 = vsel %vm75, %v74, %v70
    %vm78 = vcmask 254976
    %79 = vst.msk [vmem:[#allocation5] sm:$0x3] %vm78, %v76
    // Predicated region
    $region14: #{tpu_custom_call.1} parent=1 // pred_check
      _
    $region15: #{tpu_custom_call.1} parent=1 // pred_check_branch
      %81 = sbr.rel (0) target = $region17
    $region16: #{tpu_custom_call.1} parent=1 // pred_region
      %s83 = ssub.s32 32, 32
      %84 = vsyncadd [#allocation4], %s83
      %s86 = sshll.u32 [#allocation5], 4
      %s87 = int_to_ptr.vmem [resolvable:$true] %s86
      %89 = dma.vmem_to_hbm [thread:$0]  %s87, 32, %s2, [#allocation4]
    $region17: #{tpu_custom_call.1} parent=1 // pred_fallthru
      _
    // Predicated region
    $region18: #{tpu_custom_call.1} parent=1 // pred_check
      _
    $region19: #{tpu_custom_call.1} parent=1 // pred_check_branch
      %91 = sbr.rel (0) target = $region21
    $region20: #{tpu_custom_call.1} parent=1 // pred_region
      %92 = dma.done [#allocation4], 32
    $region21: #{tpu_custom_call.1} parent=1 // pred_fallthru
      _
    %93 = vsyncpa [#allocation3], 1
    %94 = vsyncpa [#allocation4], 1

</llo_original>
